<compile_context>
chip_gen: v7x
topology: tpu7x:2x2x1
jax: 0.10.0
libtpu: 0.0.40
codegen_flags: <defaults>
</compile_context>

<pallas_src>
import functools

import jax
import jax.numpy as jnp
from jax.experimental import pallas as pl
from jax.experimental.pallas import tpu as pltpu

_NEG_INF = -1e30                      # finite mask floor (avoids -inf - -inf NaN)
_VMEM_LIMIT = 16 * 1024 * 1024        # working set is a few MiB at tm=tn<=512


def _round_up(n, m):
    return ((n + m - 1) // m) * m


def _largest_tile(n_pad, min_blocks):
    """Largest of {512, 256, 128} dividing n_pad with at least min_blocks tiles."""
    for t in (512, 256, 128):
        if n_pad % t == 0 and n_pad // t >= min_blocks:
            return t
    return None


def _pick_tiles(n_pad):
    """n_pad is a multiple of 128.  tn: biggest lane-dense tile (fewer reduction
    steps).  tm: biggest tile that still leaves >= 2 target tiles so the
    'parallel' axis can shard across v7x's two TensorCores."""
    tn = _largest_tile(n_pad, 1)
    tm = _largest_tile(n_pad, 2)
    if tm is None:                    # n_pad == 128: can't split below lane width
        tm = tn
    return tm, tn


def _concat_lanes(parts):
    return parts[0] if len(parts) == 1 else jnp.concatenate(parts, axis=-1)


# --------------------------------------------------------------------------
# Kernel 1: fused projection (+ per-head attention logits) — one MXU matmul.
# --------------------------------------------------------------------------
def gat_project_kernel(x_ref, w_aug_ref, h_ref, adst_ref, asrc_t_ref, *,
                       out_dim, heads):
    hh = jnp.dot(x_ref[...], w_aug_ref[...], preferred_element_type=jnp.float32)
    h_ref[...] = hh[:, :out_dim].astype(h_ref.dtype)          # bf16 activations
    adst_ref[...] = hh[:, out_dim:out_dim + heads]
    # Emit the source logits already transposed (heads, tm): one XLU transpose
    # per node tile instead of once per (i, j) attend grid point.
    asrc_t_ref[...] = jnp.transpose(hh[:, out_dim + heads:])


# --------------------------------------------------------------------------
# Kernel 2: masked attention with online softmax over source-node tiles.
# --------------------------------------------------------------------------
def gat_attend_kernel(adst_ref, asrc_t_ref, h_ref, adj_ref, b_ref, o_ref,
                      m_sc, l_sc, acc_sc, *, heads, f_out, activation):
    j = pl.program_id(1)

    @pl.when(j == 0)
    def _init():
        m_sc[...] = jnp.full_like(m_sc, _NEG_INF)
        l_sc[...] = jnp.zeros_like(l_sc)
        acc_sc[...] = jnp.zeros_like(acc_sc)

    mask = adj_ref[...] != 0                           # int8 tile, no f32 widen

    a_dst = adst_ref[...]                              # (TM, heads) f32
    a_src_t = asrc_t_ref[...]                          # (heads, TN) f32
    h_src = h_ref[...]                                 # (TN, heads*f_out) bf16

    m_old_all = m_sc[...]                              # (TM, heads)
    l_old_all = l_sc[...]
    acc_old_all = acc_sc[...]                          # (TM, heads*f_out)

    m_cols, l_cols, acc_chunks = [], [], []
    for hd in range(heads):                            # heads is small & static
        sl = slice(hd * f_out, (hd + 1) * f_out)

        # e[i, j] = LeakyReLU_{0.2}( a_dst.h_i + a_src.h_j )
        e = a_dst[:, hd:hd + 1] + a_src_t[hd:hd + 1, :]        # (TM, TN)
        e = jnp.where(e > 0, e, 0.2 * e)
        e_masked = jnp.where(mask, e, _NEG_INF)

        m_old = m_old_all[:, hd:hd + 1]
        m_new = jnp.maximum(m_old, jnp.max(e_masked, axis=-1, keepdims=True))
        # Keep the select form (NOT mask-by-multiplication): unmasked exp may
        # overflow to +inf but is selected away safely.
        p = jnp.where(mask, jnp.exp(e - m_new), 0.0)           # (TM, TN) f32
        scale = jnp.exp(m_old - m_new)                          # (TM, 1)

        m_cols.append(m_new)
        l_cols.append(scale * l_old_all[:, hd:hd + 1]
                      + jnp.sum(p, axis=-1, keepdims=True))
        # bf16 MXU matmul with f32 accumulation (flash-attention tradeoff).
        acc_chunks.append(scale * acc_old_all[:, sl]
                          + jnp.dot(p.astype(h_src.dtype), h_src[:, sl],
                                    preferred_element_type=jnp.float32))

    # Single full-width stores (no per-head lane-masked stores).
    m_sc[...] = _concat_lanes(m_cols)
    l_sc[...] = _concat_lanes(l_cols)
    acc_sc[...] = _concat_lanes(acc_chunks)

    @pl.when(j == pl.num_programs(1) - 1)
    def _finalize():
        acc_all = acc_sc[...]
        l_all = jnp.maximum(l_sc[...], 1e-20)          # pad rows have no edges
        inv_l = pl.reciprocal(l_all, approx=True)      # EUP slot, ~free
        out = _concat_lanes(
            [acc_all[:, hd * f_out:(hd + 1) * f_out] * inv_l[:, hd:hd + 1]
             for hd in range(heads)])
        out = out + b_ref[...]
        if activation == "elu":
            out = jnp.where(out > 0, out, jnp.exp(out) - 1.0)
        elif activation == "log_softmax":
            # Only used with heads == 1, so the full row is one head's slice.
            m = jnp.max(out, axis=-1, keepdims=True)
            s = out - m
            out = s - jnp.log(jnp.sum(jnp.exp(s), axis=-1, keepdims=True))
        o_ref[...] = out.astype(o_ref.dtype)           # one unmasked full store


# --------------------------------------------------------------------------
# One GATConv layer = project pallas_call + attend pallas_call.
# --------------------------------------------------------------------------
def gat_layer(x, w, a_src, a_dst, bias, adj_i8, *, heads, f_out,
              activation=None):
    n, f_in = x.shape
    out_dim = heads * f_out
    if activation == "log_softmax":
        assert heads == 1, "log_softmax epilogue assumes heads == 1 (GAT layer 2)"

    n_pad = _round_up(n, 128)
    tm, tn = _pick_tiles(n_pad)

    x_p = jnp.pad(x, ((0, n_pad - n), (0, 0))) if n_pad != n else x
    adj_p = (jnp.pad(adj_i8, ((0, n_pad - n), (0, n_pad - n)))
             if n_pad != n else adj_i8)

    # Fold per-head attention vectors into the projection weights:
    #   adst = (x @ W) @ A_dst = x @ (W @ A_dst)   with block-diagonal A_*
    # so the project kernel issues a single MXU matmul against W_aug.
    eye = jnp.eye(heads, dtype=jnp.float32)
    a_dst_bd = (a_dst[:, :, None] * eye[:, None, :]).reshape(out_dim, heads)
    a_src_bd = (a_src[:, :, None] * eye[:, None, :]).reshape(out_dim, heads)
    w_aug = jnp.concatenate([w, w @ a_dst_bd, w @ a_src_bd], axis=1)
    aug_dim = out_dim + 2 * heads

    project = functools.partial(gat_project_kernel, out_dim=out_dim, heads=heads)
    h, adst, asrc_t = pl.pallas_call(
        project,
        out_shape=(jax.ShapeDtypeStruct((n_pad, out_dim), jnp.bfloat16),
                   jax.ShapeDtypeStruct((n_pad, heads), jnp.float32),
                   jax.ShapeDtypeStruct((heads, n_pad), jnp.float32)),
        grid_spec=pltpu.PrefetchScalarGridSpec(
            num_scalar_prefetch=0,
            grid=(n_pad // tm,),
            in_specs=[pl.BlockSpec((tm, f_in), lambda i: (i, 0)),
                      pl.BlockSpec((f_in, aug_dim), lambda i: (0, 0))],
            out_specs=(pl.BlockSpec((tm, out_dim), lambda i: (i, 0)),
                       pl.BlockSpec((tm, heads), lambda i: (i, 0)),
                       pl.BlockSpec((heads, tm), lambda i: (0, i)))),
        compiler_params=pltpu.CompilerParams(
            dimension_semantics=("parallel",),
            vmem_limit_bytes=_VMEM_LIMIT),
    )(x_p, w_aug)

    attend = functools.partial(gat_attend_kernel, heads=heads, f_out=f_out,
                               activation=activation)
    # TODO(synk): on v5e, bit-pack the adjacency (1 bit/edge) and/or bump its
    # BlockSpec to pipeline_mode=pl.Buffered(3) if the int8 stream shows
    # exposed DMA; int8 is kept here for simplicity.
    out = pl.pallas_call(
        attend,
        out_shape=jax.ShapeDtypeStruct((n_pad, out_dim), jnp.float32),
        grid_spec=pltpu.PrefetchScalarGridSpec(
            num_scalar_prefetch=0,
            grid=(n_pad // tm, n_pad // tn),
            in_specs=[pl.BlockSpec((tm, heads), lambda i, j: (i, 0)),    # dst logits
                      pl.BlockSpec((heads, tn), lambda i, j: (0, j)),    # src logits (T)
                      pl.BlockSpec((tn, out_dim), lambda i, j: (j, 0)),  # h (bf16 values)
                      pl.BlockSpec((tm, tn), lambda i, j: (i, j)),       # adjacency (int8)
                      pl.BlockSpec((1, out_dim), lambda i, j: (0, 0))],  # bias
            out_specs=pl.BlockSpec((tm, out_dim), lambda i, j: (i, 0)),
            scratch_shapes=[pltpu.VMEM((tm, heads), jnp.float32),    # running max m
                            pltpu.VMEM((tm, heads), jnp.float32),    # running sum l
                            pltpu.VMEM((tm, out_dim), jnp.float32)]),  # accumulator
        compiler_params=pltpu.CompilerParams(
            dimension_semantics=("parallel", "arbitrary"),
            vmem_limit_bytes=_VMEM_LIMIT),
    )(adst, asrc_t, h, adj_p, bias)

    return out[:n]


def gat_forward(x, adj, params):
    """Full GAT forward: conv1 -> ELU -> conv2 -> log_softmax(dim=1)."""
    # TODO(synk): fuse the two layers (keep h1/adst/asrc resident in VMEM via a
    # single pallas_call or cross-call VMEM futures) to avoid h1's HBM round-trip.
    p1, p2 = params["conv1"], params["conv2"]
    h = gat_layer(x, p1["w"], p1["a_src"], p1["a_dst"], p1["b"], adj,
                  heads=p1["heads"], f_out=p1["f_out"], activation="elu")
    out = gat_layer(h, p2["w"], p2["a_src"], p2["a_dst"], p2["b"], adj,
                    heads=p2["heads"], f_out=p2["f_out"],
                    activation="log_softmax")
    return out


def glorot(key, shape):
    fan_in, fan_out = shape[-2], shape[-1]
    limit = jnp.sqrt(6.0 / (fan_in + fan_out))
    return jax.random.uniform(key, shape, jnp.float32, -limit, limit)


def init_params(key, in_channels, hidden_channels, out_channels):
    k = jax.random.split(key, 6)
    heads1 = 8
    params = {
        "conv1": {
            "heads": heads1, "f_out": hidden_channels,
            "w": glorot(k[0], (in_channels, heads1 * hidden_channels)),
            "a_src": glorot(k[1], (heads1, hidden_channels)),
            "a_dst": glorot(k[2], (heads1, hidden_channels)),
            "b": jnp.zeros((1, heads1 * hidden_channels), jnp.float32),
        },
        "conv2": {
            "heads": 1, "f_out": out_channels,
            "w": glorot(k[3], (heads1 * hidden_channels, out_channels)),
            "a_src": glorot(k[4], (1, out_channels)),
            "a_dst": glorot(k[5], (1, out_channels)),
            "b": jnp.zeros((1, out_channels), jnp.float32),
        },
    }
    return params


def build_dense_adj(edge_index, num_nodes):
    """int8 adj[target, source] = 1 for each edge, plus self-loops (PyG default)."""
    src, dst = edge_index[0], edge_index[1]
    adj = jnp.zeros((num_nodes, num_nodes), jnp.int8)
    adj = adj.at[dst, src].set(1)
    diag = jnp.arange(num_nodes)
    adj = adj.at[diag, diag].set(1)
    return adj


if __name__ == "__main__":
    N = 16            # nodes
    IN_C = 8          # in_channels
    HID_C = 8         # hidden_channels (per head; 8 heads -> 64 after conv1)
    OUT_C = 4         # out_channels (classes)

    key = jax.random.PRNGKey(0)
    kx, kp = jax.random.split(key)

    # Node features.
    x = jax.random.normal(kx, (N, IN_C), jnp.float32)

    # Deterministic ring graph: i -> i+1 and i -> i-1 (mod N).
    idx = jnp.arange(N)
    src = jnp.concatenate([idx, idx])
    dst = jnp.concatenate([(idx + 1) % N, (idx - 1) % N])
    edge_index = jnp.stack([src, dst], axis=0)               # (2, 2N)

    adj = build_dense_adj(edge_index, N)
    params = init_params(kp, IN_C, HID_C, OUT_C)

    out = gat_forward(x, adj, params)
    out = jax.block_until_ready(out)

    assert out.shape == (N, OUT_C)
    assert bool(jnp.all(jnp.isfinite(out)))
    # Rows of log_softmax should exp-sum to 1.
    assert bool(jnp.allclose(jnp.sum(jnp.exp(out), axis=1), 1.0, atol=1e-3))
    print("KERNEL_OK")
</pallas_src>

<mosaic_0001>
module attributes {stable_mosaic.version = 11 : i64} {
  func.func @gat_project_kernel(%arg0: i32, %arg1: memref<128x8xf32, #tpu.memory_space<vmem>>, %arg2: memref<8x80xf32, #tpu.memory_space<vmem>>, %arg3: memref<128x64xbf16, #tpu.memory_space<vmem>>, %arg4: memref<128x8xf32, #tpu.memory_space<vmem>>, %arg5: memref<8x128xf32, #tpu.memory_space<vmem>>) attributes {dimension_semantics = [#tpu.dimension_semantics<parallel>], iteration_bounds = array<i64: 1>, scalar_prefetch = 0 : i64, scratch_operands = 0 : i64, tpu.core_type = #tpu.core_type<tc>, window_params = [{transform_indices = @transform_0, window_bounds = array<i64: 128, 8>}, {pipeline_mode = #tpu.pipeline_mode<synchronous>, transform_indices = @transform_1, window_bounds = array<i64: 8, 80>}, {transform_indices = @transform_2, window_bounds = array<i64: 128, 64>}, {transform_indices = @transform_3, window_bounds = array<i64: 128, 8>}, {transform_indices = @transform_4, window_bounds = array<i64: 8, 128>}]} {
    %c0 = arith.constant 0 : index
    %c0_0 = arith.constant 0 : index
    %0 = vector.load %arg1[%c0, %c0_0] : memref<128x8xf32, #tpu.memory_space<vmem>>, vector<128x8xf32>
    %c0_1 = arith.constant 0 : index
    %c0_2 = arith.constant 0 : index
    %1 = vector.load %arg2[%c0_1, %c0_2] : memref<8x80xf32, #tpu.memory_space<vmem>>, vector<8x80xf32>
    %cst = arith.constant dense<0.000000e+00> : vector<128x80xf32>
    %2 = tpu.matmul %0, %1, %cst {dimension_numbers = #tpu.dot_dimension_numbers<[1], [0], [0], [1], [0, 0, 1, 1], [], []>} : vector<128x8xf32>, vector<8x80xf32>, vector<128x80xf32> -> vector<128x80xf32>
    %3 = vector.extract_strided_slice %2 {offsets = [0, 0], sizes = [128, 64], strides = [1, 1]} : vector<128x80xf32> to vector<128x64xf32>
    %4 = arith.truncf %3 : vector<128x64xf32> to vector<128x64xbf16>
    %c0_3 = arith.constant 0 : index
    %c0_4 = arith.constant 0 : index
    %5 = vector.load %arg3[%c0_3, %c0_4] : memref<128x64xbf16, #tpu.memory_space<vmem>>, vector<128x64xbf16>
    tpu.vector_store %arg3[%c0_3, %c0_4], %4 {strides = array<i32>} : memref<128x64xbf16, #tpu.memory_space<vmem>>, vector<128x64xbf16>,
    %6 = vector.extract_strided_slice %2 {offsets = [0, 64], sizes = [128, 8], strides = [1, 1]} : vector<128x80xf32> to vector<128x8xf32>
    %c0_5 = arith.constant 0 : index
    %c0_6 = arith.constant 0 : index
    %7 = vector.load %arg4[%c0_5, %c0_6] : memref<128x8xf32, #tpu.memory_space<vmem>>, vector<128x8xf32>
    tpu.vector_store %arg4[%c0_5, %c0_6], %6 {strides = array<i32>} : memref<128x8xf32, #tpu.memory_space<vmem>>, vector<128x8xf32>,
    %8 = vector.extract_strided_slice %2 {offsets = [0, 72], sizes = [128, 8], strides = [1, 1]} : vector<128x80xf32> to vector<128x8xf32>
    %9 = tpu.transpose %8, [1, 0] : vector<128x8xf32> -> vector<8x128xf32>
    %c0_7 = arith.constant 0 : index
    %c0_8 = arith.constant 0 : index
    %10 = vector.load %arg5[%c0_7, %c0_8] : memref<8x128xf32, #tpu.memory_space<vmem>>, vector<8x128xf32>
    tpu.vector_store %arg5[%c0_7, %c0_8], %9 {strides = array<i32>} : memref<8x128xf32, #tpu.memory_space<vmem>>, vector<8x128xf32>,
    return
  }
  func.func @transform_0(%arg0: i32) -> (i32, i32) {
    %c0_i32 = arith.constant 0 : i32
    %c0_i32_0 = arith.constant 0 : i32
    return %arg0, %c0_i32 : i32, i32
  }
  func.func @transform_1(%arg0: i32) -> (i32, i32) {
    %c0_i32 = arith.constant 0 : i32
    %c0_i32_0 = arith.constant 0 : i32
    %c0_i32_1 = arith.constant 0 : i32
    return %c0_i32, %c0_i32_0 : i32, i32
  }
  func.func @transform_2(%arg0: i32) -> (i32, i32) {
    %c0_i32 = arith.constant 0 : i32
    %c0_i32_0 = arith.constant 0 : i32
    return %arg0, %c0_i32 : i32, i32
  }
  func.func @transform_3(%arg0: i32) -> (i32, i32) {
    %c0_i32 = arith.constant 0 : i32
    %c0_i32_0 = arith.constant 0 : i32
    return %arg0, %c0_i32 : i32, i32
  }
  func.func @transform_4(%arg0: i32) -> (i32, i32) {
    %c0_i32 = arith.constant 0 : i32
    %c0_i32_0 = arith.constant 0 : i32
    return %c0_i32, %arg0 : i32, i32
  }
}

</mosaic_0001>

<llo_original>
// kernel: tpu_custom_call.1
$region0: #{tpu_custom_call.1}
  #allocation0 [shape = 'u32[]', space=smem, size = 0x4, offset = 0x4, fixed_abs, tag = 'smem constant byte address 0x4 - core index']
  #allocation1 [shape = 'u32[144,128]{1,0:T(1,128)}', space=vmem, size = 0x12000, scoped, tag = 'internal scratch']
  %s0 = inlined_call_operand.vmem [shape: f32[128,8], index: 0, kind: input, shape index: {}]
  %s1 = inlined_call_operand.vmem [shape: f32[8,80], index: 1, kind: input, shape index: {}]
  %s2 = inlined_call_operand.vmem [shape: bf16[128,64], index: 2, kind: output, shape index: {0}]
  %s3 = inlined_call_operand.vmem [shape: f32[128,8], index: 3, kind: output, shape index: {1}]
  %s4 = inlined_call_operand.hbm [shape: f32[8,128], index: 4, kind: output, shape index: {2}]
  %5 = xla_tuple %s2, %s3, %s4
  %s6 = sld [smem:[#allocation0]]
  $region34: #{tpu_custom_call.1} parent=0
    _
  %s8 = ssub.s32 1, %s6
  %s9 = scalar_select 0, %s8, %s6
  $region1: #{tpu_custom_call.1} parent=0
    #allocation2 [shape = 'u8[4096]{0}', space=vmem, size = 0x1000, scoped, tag = 'output window, operand 2, single buffered']
    #allocation3 [shape = 's32[1]{0}', space=sflag, size = 0x4, scoped, tag = 'scoped memory for tpu_custom_call.1']
    %10 = vsyncpa [#allocation3], 0
    // Predicated region
    $region2: #{tpu_custom_call.1} parent=1 // pred_check
      _
    $region3: #{tpu_custom_call.1} parent=1 // pred_check_branch
      %12 = sbr.rel (0) target = $region5
    $region4: #{tpu_custom_call.1} parent=1 // pred_region
      _
    $region5: #{tpu_custom_call.1} parent=1 // pred_fallthru
      _
    // Predicated region
    $region6: #{tpu_custom_call.1} parent=1 // pred_check
      _
    $region7: #{tpu_custom_call.1} parent=1 // pred_check_branch
      %14 = sbr.rel (0) target = $region9
    $region8: #{tpu_custom_call.1} parent=1 // pred_region
      _
    $region9: #{tpu_custom_call.1} parent=1 // pred_fallthru
      _
    %v15 = vld [vmem:[%s0] sm:$0xff]
    %v16 = vld [vmem:[%s0 + $0x8] sm:$0xff]
    %v17 = vld [vmem:[%s0 + $0x10] sm:$0xff]
    %v18 = vld [vmem:[%s0 + $0x18] sm:$0xff]
    %v19 = vld [vmem:[%s0 + $0x20] sm:$0xff]
    %v20 = vld [vmem:[%s0 + $0x28] sm:$0xff]
    %v21 = vld [vmem:[%s0 + $0x30] sm:$0xff]
    %v22 = vld [vmem:[%s0 + $0x38] sm:$0xff]
    %v23 = vld [vmem:[%s0 + $0x40] sm:$0xff]
    %v24 = vld [vmem:[%s0 + $0x48] sm:$0xff]
    %v25 = vld [vmem:[%s0 + $0x50] sm:$0xff]
    %v26 = vld [vmem:[%s0 + $0x58] sm:$0xff]
    %v27 = vld [vmem:[%s0 + $0x60] sm:$0xff]
    %v28 = vld [vmem:[%s0 + $0x68] sm:$0xff]
    %v29 = vld [vmem:[%s0 + $0x70] sm:$0xff]
    %v30 = vld [vmem:[%s0 + $0x78] sm:$0xff]
    %v31 = vld [vmem:[%s1] sm:$0xff]
    %vm32 = vcmask 64512
    %v34 = vsel %vm32, %v15, 0
    %v37 = vsel %vm32, %v16, 0
    %v40 = vsel %vm32, %v17, 0
    %v43 = vsel %vm32, %v18, 0
    %v46 = vsel %vm32, %v19, 0
    %v49 = vsel %vm32, %v20, 0
    %v52 = vsel %vm32, %v21, 0
    %v55 = vsel %vm32, %v22, 0
    %v58 = vsel %vm32, %v23, 0
    %v61 = vsel %vm32, %v24, 0
    %v64 = vsel %vm32, %v25, 0
    %v67 = vsel %vm32, %v26, 0
    %v70 = vsel %vm32, %v27, 0
    %v73 = vsel %vm32, %v28, 0
    %v76 = vsel %vm32, %v29, 0
    %v79 = vsel %vm32, %v30, 0
    %81 = vmatprep.subr.mxu0 0.0
    %82 = vmatpush1.msra.mxu0 %v31
    %83 = vmatprep.subr.mxu0 0.0
    %84 = vmatpush1.msra.mxu0 0.0
    %85 = vmatprep.subr.mxu0 0.0
    %86 = vmatpush1.msra.mxu0 0.0
    %87 = vmatprep.subr.mxu0 0.0
    %88 = vmatpush1.msra.mxu0 0.0
    %89 = vmatprep.subr.mxu0 0.0
    %90 = vmatpush1.msra.mxu0 0.0
    %91 = vmatprep.subr.mxu0 0.0
    %92 = vmatpush1.msra.mxu0 0.0
    %93 = vmatprep.subr.mxu0 0.0
    %94 = vmatpush1.msra.mxu0 0.0
    %95 = vmatprep.subr.mxu0 0.0
    %96 = vmatpush1.msra.mxu0 0.0
    %97 = vmatprep.subr.mxu0 0.0
    %98 = vmatpush1.msra.mxu0 0.0
    %99 = vmatprep.subr.mxu0 0.0
    %100 = vmatpush1.msra.mxu0 0.0
    %101 = vmatprep.subr.mxu0 0.0
    %102 = vmatpush1.msra.mxu0 0.0
    %103 = vmatprep.subr.mxu0 0.0
    %104 = vmatpush1.msra.mxu0 0.0
    %105 = vmatprep.subr.mxu0 0.0
    %106 = vmatpush1.msra.mxu0 0.0
    %107 = vmatprep.subr.mxu0 0.0
    %108 = vmatpush1.msra.mxu0 0.0
    %109 = vmatprep.subr.mxu0 0.0
    %110 = vmatpush1.msra.mxu0 0.0
    %111 = vmatprep.subr.mxu0 0.0
    %112 = vmatpush1.msra.mxu0 0.0
    %113 = vmatprep.subr.mxu0 0.0
    %114 = vmatpush1.msra.mxu0 0.0
    %115 = vmatprep.subr.mxu0 0.0
    %116 = vmatpush1.msra.mxu0 0.0
    %117 = vmatprep.subr.mxu0 0.0
    %118 = vmatpush1.msra.mxu0 0.0
    %119 = vmatprep.subr.mxu0 0.0
    %120 = vmatpush1.msra.mxu0 0.0
    %121 = vmatprep.subr.mxu0 0.0
    %122 = vmatpush1.msra.mxu0 0.0
    %123 = vmatprep.subr.mxu0 0.0
    %124 = vmatpush1.msra.mxu0 0.0
    %125 = vmatprep.subr.mxu0 0.0
    %126 = vmatpush1.msra.mxu0 0.0
    %127 = vmatprep.subr.mxu0 0.0
    %128 = vmatpush1.msra.mxu0 0.0
    %129 = vmatprep.subr.mxu0 0.0
    %130 = vmatpush1.msra.mxu0 0.0
    %131 = vmatprep.subr.mxu0 0.0
    %132 = vmatpush1.msra.mxu0 0.0
    %133 = vmatprep.subr.mxu0 0.0
    %134 = vmatpush1.msra.mxu0 0.0
    %135 = vmatprep.subr.mxu0 0.0
    %136 = vmatpush1.msra.mxu0 0.0
    %137 = vmatprep.subr.mxu0 0.0
    %138 = vmatpush1.msra.mxu0 0.0
    %139 = vmatprep.subr.mxu0 0.0
    %140 = vmatpush1.msra.mxu0 0.0
    %141 = vmatprep.subr.mxu0 0.0
    %142 = vmatpush1.msra.mxu0 0.0
    %143 = vmatprep.subr.mxu0 0.0
    %144 = vmatpush1.msra.mxu0 0.0
    %145 = vmatprep.mubr.f32.mxu0 0.0
    %146 = vmatmul.mubr.f32.gmra.mrb[0].mxu0 %v34
    %v147 = vpop.f32.mrb[0].mxu0
    %v148 = vadd.f32 0.0, %v147
    %v149 = vpop.f32.mrb[0].mxu0
    %150 = vmatprep.mubr.f32.mxu0 0.0
    %151 = vmatmul.mubr.f32.gmra.mrb[0].mxu0 %v37
    %v152 = vpop.f32.mrb[0].mxu0
    %v153 = vadd.f32 0.0, %v152
    %v154 = vpop.f32.mrb[0].mxu0
    %155 = vmatprep.mubr.f32.mxu0 0.0
    %156 = vmatmul.mubr.f32.gmra.mrb[0].mxu0 %v40
    %v157 = vpop.f32.mrb[0].mxu0
    %v158 = vadd.f32 0.0, %v157
    %v159 = vpop.f32.mrb[0].mxu0
    %160 = vmatprep.mubr.f32.mxu0 0.0
    %161 = vmatmul.mubr.f32.gmra.mrb[0].mxu0 %v43
    %v162 = vpop.f32.mrb[0].mxu0
    %v163 = vadd.f32 0.0, %v162
    %v164 = vpop.f32.mrb[0].mxu0
    %165 = vmatprep.mubr.f32.mxu0 0.0
    %166 = vmatmul.mubr.f32.gmra.mrb[0].mxu0 %v46
    %v167 = vpop.f32.mrb[0].mxu0
    %v168 = vadd.f32 0.0, %v167
    %v169 = vpop.f32.mrb[0].mxu0
    %170 = vmatprep.mubr.f32.mxu0 0.0
    %171 = vmatmul.mubr.f32.gmra.mrb[0].mxu0 %v49
    %v172 = vpop.f32.mrb[0].mxu0
    %v173 = vadd.f32 0.0, %v172
    %v174 = vpop.f32.mrb[0].mxu0
    %175 = vmatprep.mubr.f32.mxu0 0.0
    %176 = vmatmul.mubr.f32.gmra.mrb[0].mxu0 %v52
    %v177 = vpop.f32.mrb[0].mxu0
    %v178 = vadd.f32 0.0, %v177
    %v179 = vpop.f32.mrb[0].mxu0
    %180 = vmatprep.mubr.f32.mxu0 0.0
    %181 = vmatmul.mubr.f32.gmra.mrb[0].mxu0 %v55
    %v182 = vpop.f32.mrb[0].mxu0
    %v183 = vadd.f32 0.0, %v182
    %v184 = vpop.f32.mrb[0].mxu0
    %185 = vmatprep.mubr.f32.mxu0 0.0
    %186 = vmatmul.mubr.f32.gmra.mrb[0].mxu0 %v58
    %v187 = vpop.f32.mrb[0].mxu0
    %v188 = vadd.f32 0.0, %v187
    %v189 = vpop.f32.mrb[0].mxu0
    %190 = vmatprep.mubr.f32.mxu0 0.0
    %191 = vmatmul.mubr.f32.gmra.mrb[0].mxu0 %v61
    %v192 = vpop.f32.mrb[0].mxu0
    %v193 = vadd.f32 0.0, %v192
    %v194 = vpop.f32.mrb[0].mxu0
    %195 = vmatprep.mubr.f32.mxu0 0.0
    %196 = vmatmul.mubr.f32.gmra.mrb[0].mxu0 %v64
    %v197 = vpop.f32.mrb[0].mxu0
    %v198 = vadd.f32 0.0, %v197
    %v199 = vpop.f32.mrb[0].mxu0
    %200 = vmatprep.mubr.f32.mxu0 0.0
    %201 = vmatmul.mubr.f32.gmra.mrb[0].mxu0 %v67
    %v202 = vpop.f32.mrb[0].mxu0
    %v203 = vadd.f32 0.0, %v202
    %v204 = vpop.f32.mrb[0].mxu0
    %205 = vmatprep.mubr.f32.mxu0 0.0
    %206 = vmatmul.mubr.f32.gmra.mrb[0].mxu0 %v70
    %v207 = vpop.f32.mrb[0].mxu0
    %v208 = vadd.f32 0.0, %v207
    %v209 = vpop.f32.mrb[0].mxu0
    %210 = vmatprep.mubr.f32.mxu0 0.0
    %211 = vmatmul.mubr.f32.gmra.mrb[0].mxu0 %v73
    %v212 = vpop.f32.mrb[0].mxu0
    %v213 = vadd.f32 0.0, %v212
    %v214 = vpop.f32.mrb[0].mxu0
    %215 = vmatprep.mubr.f32.mxu0 0.0
    %216 = vmatmul.mubr.f32.gmra.mrb[0].mxu0 %v76
    %v217 = vpop.f32.mrb[0].mxu0
    %v218 = vadd.f32 0.0, %v217
    %v219 = vpop.f32.mrb[0].mxu0
    %220 = vmatprep.mubr.f32.mxu0 0.0
    %221 = vmatmul.mubr.f32.gmra.mrb[0].mxu0 %v79
    %v222 = vpop.f32.mrb[0].mxu0
    %v223 = vadd.f32 0.0, %v222
    %v224 = vpop.f32.mrb[0].mxu0
    %225 = vdwg.mxu0
    %v226 = vpack.c.bf16 %v153, %v148
    %v227 = vpack.c.bf16 %v163, %v158
    %v228 = vpack.c.bf16 %v173, %v168
    %v229 = vpack.c.bf16 %v183, %v178
    %v230 = vpack.c.bf16 %v193, %v188
    %v231 = vpack.c.bf16 %v203, %v198
    %v232 = vpack.c.bf16 %v213, %v208
    %v233 = vpack.c.bf16 %v223, %v218
    %v242 = vunpack.c.l.b16 %v226
    %v243 = vunpack.c.h.b16 %v226
    %v244 = vunpack.c.l.b16 %v227
    %v245 = vunpack.c.h.b16 %v227
    %v246 = vunpack.c.l.b16 %v228
    %v247 = vunpack.c.h.b16 %v228
    %v248 = vunpack.c.l.b16 %v229
    %v249 = vunpack.c.h.b16 %v229
    %v250 = vunpack.c.l.b16 %v230
    %v251 = vunpack.c.h.b16 %v230
    %v252 = vunpack.c.l.b16 %v231
    %v253 = vunpack.c.h.b16 %v231
    %v254 = vunpack.c.l.b16 %v232
    %v255 = vunpack.c.h.b16 %v232
    %v256 = vunpack.c.l.b16 %v233
    %v257 = vunpack.c.h.b16 %v233
    %v258 = vpack.c.b16 %v242, %v242
    %v259 = vpack.c.b16 %v243, %v243
    %v260 = vpack.c.b16 %v244, %v244
    %v261 = vpack.c.b16 %v245, %v245
    %v262 = vpack.c.b16 %v246, %v246
    %v263 = vpack.c.b16 %v247, %v247
    %v264 = vpack.c.b16 %v248, %v248
    %v265 = vpack.c.b16 %v249, %v249
    %v266 = vpack.c.b16 %v250, %v250
    %v267 = vpack.c.b16 %v251, %v251
    %v268 = vpack.c.b16 %v252, %v252
    %v269 = vpack.c.b16 %v253, %v253
    %v270 = vpack.c.b16 %v254, %v254
    %v271 = vpack.c.b16 %v255, %v255
    %v272 = vpack.c.b16 %v256, %v256
    %v273 = vpack.c.b16 %v257, %v257
    %vm290 = vcmask 519168
    %291 = vst.msk [vmem:[%s2] sm:$0xf] %vm290, %v258
    %292 = vst.msk [vmem:[%s2 + $0x4] sm:$0xf] %vm290, %v259
    %293 = vst.msk [vmem:[%s2 + $0x8] sm:$0xf] %vm290, %v260
    %294 = vst.msk [vmem:[%s2 + $0xc] sm:$0xf] %vm290, %v261
    %295 = vst.msk [vmem:[%s2 + $0x10] sm:$0xf] %vm290, %v262
    %296 = vst.msk [vmem:[%s2 + $0x14] sm:$0xf] %vm290, %v263
    %297 = vst.msk [vmem:[%s2 + $0x18] sm:$0xf] %vm290, %v264
    %298 = vst.msk [vmem:[%s2 + $0x1c] sm:$0xf] %vm290, %v265
    %299 = vst.msk [vmem:[%s2 + $0x20] sm:$0xf] %vm290, %v266
    %300 = vst.msk [vmem:[%s2 + $0x24] sm:$0xf] %vm290, %v267
    %301 = vst.msk [vmem:[%s2 + $0x28] sm:$0xf] %vm290, %v268
    %302 = vst.msk [vmem:[%s2 + $0x2c] sm:$0xf] %vm290, %v269
    %303 = vst.msk [vmem:[%s2 + $0x30] sm:$0xf] %vm290, %v270
    %304 = vst.msk [vmem:[%s2 + $0x34] sm:$0xf] %vm290, %v271
    %305 = vst.msk [vmem:[%s2 + $0x38] sm:$0xf] %vm290, %v272
    %306 = vst.msk [vmem:[%s2 + $0x3c] sm:$0xf] %vm290, %v273
    %323 = vrot.lane.b32.xlu0 %v148, 64
    %v324 = vpop.permute.xlu0 %323
    %325 = vrot.lane.b32.xlu0 %v153, 64
    %v326 = vpop.permute.xlu0 %325
    %327 = vrot.lane.b32.xlu0 %v158, 64
    %v328 = vpop.permute.xlu0 %327
    %329 = vrot.lane.b32.xlu0 %v163, 64
    %v330 = vpop.permute.xlu0 %329
    %331 = vrot.lane.b32.xlu0 %v168, 64
    %v332 = vpop.permute.xlu0 %331
    %333 = vrot.lane.b32.xlu0 %v173, 64
    %v334 = vpop.permute.xlu0 %333
    %335 = vrot.lane.b32.xlu0 %v178, 64
    %v336 = vpop.permute.xlu0 %335
    %337 = vrot.lane.b32.xlu0 %v183, 64
    %v338 = vpop.permute.xlu0 %337
    %339 = vrot.lane.b32.xlu0 %v188, 64
    %v340 = vpop.permute.xlu0 %339
    %341 = vrot.lane.b32.xlu0 %v193, 64
    %v342 = vpop.permute.xlu0 %341
    %343 = vrot.lane.b32.xlu0 %v198, 64
    %v344 = vpop.permute.xlu0 %343
    %345 = vrot.lane.b32.xlu0 %v203, 64
    %v346 = vpop.permute.xlu0 %345
    %347 = vrot.lane.b32.xlu0 %v208, 64
    %v348 = vpop.permute.xlu0 %347
    %349 = vrot.lane.b32.xlu0 %v213, 64
    %v350 = vpop.permute.xlu0 %349
    %351 = vrot.lane.b32.xlu0 %v218, 64
    %v352 = vpop.permute.xlu0 %351
    %353 = vrot.lane.b32.xlu0 %v223, 64
    %v354 = vpop.permute.xlu0 %353
    %371 = vst.msk [vmem:[%s3] sm:$0xff] %vm32, %v324
    %372 = vst.msk [vmem:[%s3 + $0x8] sm:$0xff] %vm32, %v326
    %373 = vst.msk [vmem:[%s3 + $0x10] sm:$0xff] %vm32, %v328
    %374 = vst.msk [vmem:[%s3 + $0x18] sm:$0xff] %vm32, %v330
    %375 = vst.msk [vmem:[%s3 + $0x20] sm:$0xff] %vm32, %v332
    %376 = vst.msk [vmem:[%s3 + $0x28] sm:$0xff] %vm32, %v334
    %377 = vst.msk [vmem:[%s3 + $0x30] sm:$0xff] %vm32, %v336
    %378 = vst.msk [vmem:[%s3 + $0x38] sm:$0xff] %vm32, %v338
    %379 = vst.msk [vmem:[%s3 + $0x40] sm:$0xff] %vm32, %v340
    %380 = vst.msk [vmem:[%s3 + $0x48] sm:$0xff] %vm32, %v342
    %381 = vst.msk [vmem:[%s3 + $0x50] sm:$0xff] %vm32, %v344
    %382 = vst.msk [vmem:[%s3 + $0x58] sm:$0xff] %vm32, %v346
    %383 = vst.msk [vmem:[%s3 + $0x60] sm:$0xff] %vm32, %v348
    %384 = vst.msk [vmem:[%s3 + $0x68] sm:$0xff] %vm32, %v350
    %385 = vst.msk [vmem:[%s3 + $0x70] sm:$0xff] %vm32, %v352
    %386 = vst.msk [vmem:[%s3 + $0x78] sm:$0xff] %vm32, %v354
    %387 = vrot.lane.b32.xlu0 %v148, 56
    %v388 = vpop.permute.xlu0 %387
    %389 = vrot.lane.b32.xlu0 %v153, 56
    %v390 = vpop.permute.xlu0 %389
    %391 = vrot.lane.b32.xlu0 %v158, 56
    %v392 = vpop.permute.xlu0 %391
    %393 = vrot.lane.b32.xlu0 %v163, 56
    %v394 = vpop.permute.xlu0 %393
    %395 = vrot.lane.b32.xlu0 %v168, 56
    %v396 = vpop.permute.xlu0 %395
    %397 = vrot.lane.b32.xlu0 %v173, 56
    %v398 = vpop.permute.xlu0 %397
    %399 = vrot.lane.b32.xlu0 %v178, 56
    %v400 = vpop.permute.xlu0 %399
    %401 = vrot.lane.b32.xlu0 %v183, 56
    %v402 = vpop.permute.xlu0 %401
    %403 = vrot.lane.b32.xlu0 %v188, 56
    %v404 = vpop.permute.xlu0 %403
    %405 = vrot.lane.b32.xlu0 %v193, 56
    %v406 = vpop.permute.xlu0 %405
    %407 = vrot.lane.b32.xlu0 %v198, 56
    %v408 = vpop.permute.xlu0 %407
    %409 = vrot.lane.b32.xlu0 %v203, 56
    %v410 = vpop.permute.xlu0 %409
    %411 = vrot.lane.b32.xlu0 %v208, 56
    %v412 = vpop.permute.xlu0 %411
    %413 = vrot.lane.b32.xlu0 %v213, 56
    %v414 = vpop.permute.xlu0 %413
    %415 = vrot.lane.b32.xlu0 %v218, 56
    %v416 = vpop.permute.xlu0 %415
    %417 = vrot.lane.b32.xlu0 %v223, 56
    %v418 = vpop.permute.xlu0 %417
    %435 = vxpose.xlu0.b32.start [1/16] %v388, 128
    %436 = vxpose.xlu0.b32.cont [2/16] %v390, 128
    %437 = vxpose.xlu0.b32.cont [3/16] %v392, 128
    %438 = vxpose.xlu0.b32.cont [4/16] %v394, 128
    %439 = vxpose.xlu0.b32.cont [5/16] %v396, 128
    %440 = vxpose.xlu0.b32.cont [6/16] %v398, 128
    %441 = vxpose.xlu0.b32.cont [7/16] %v400, 128
    %442 = vxpose.xlu0.b32.cont [8/16] %v402, 128
    %443 = vxpose.xlu0.b32.cont [9/16] %v404, 128
    %444 = vxpose.xlu0.b32.cont [10/16] %v406, 128
    %445 = vxpose.xlu0.b32.cont [11/16] %v408, 128
    %446 = vxpose.xlu0.b32.cont [12/16] %v410, 128
    %447 = vxpose.xlu0.b32.cont [13/16] %v412, 128
    %448 = vxpose.xlu0.b32.cont [14/16] %v414, 128
    %449 = vxpose.xlu0.b32.cont [15/16] %v416, 128
    %450 = vxpose.xlu0.b32.end [16/16] %v418, 128
    %v451 = vpop.trf.xlu0
    %v452 = vpop.trf.xlu0
    %v453 = vpop.trf.xlu0
    %v454 = vpop.trf.xlu0
    %v455 = vpop.trf.xlu0
    %v456 = vpop.trf.xlu0
    %v457 = vpop.trf.xlu0
    %v458 = vpop.trf.xlu0
    %v459 = vpop.trf.xlu0
    %v460 = vpop.trf.xlu0
    %v461 = vpop.trf.xlu0
    %v462 = vpop.trf.xlu0
    %v463 = vpop.trf.xlu0
    %v464 = vpop.trf.xlu0
    %v465 = vpop.trf.xlu0
    %v466 = vpop.trf.xlu0
    %467 = vst [vmem:[#allocation2] sm:$0xff] %v451
    // Predicated region
    $region10: #{tpu_custom_call.1} parent=1 // pred_check
      _
    $region11: #{tpu_custom_call.1} parent=1 // pred_check_branch
      %469 = sbr.rel (0) target = $region13
    $region12: #{tpu_custom_call.1} parent=1 // pred_region
      _
    $region13: #{tpu_custom_call.1} parent=1 // pred_fallthru
      _
    // Predicated region
    $region14: #{tpu_custom_call.1} parent=1 // pred_check
      _
    $region15: #{tpu_custom_call.1} parent=1 // pred_check_branch
      %471 = sbr.rel (0) target = $region17
    $region16: #{tpu_custom_call.1} parent=1 // pred_region
      _
    $region17: #{tpu_custom_call.1} parent=1 // pred_fallthru
      _
    // Predicated region
    $region18: #{tpu_custom_call.1} parent=1 // pred_check
      _
    $region19: #{tpu_custom_call.1} parent=1 // pred_check_branch
      %473 = sbr.rel (0) target = $region21
    $region20: #{tpu_custom_call.1} parent=1 // pred_region
      %s475 = ssub.s32 128, 128
      %476 = vsyncadd [#allocation3], %s475
      %s478 = sshll.u32 [#allocation2], 4
      %s479 = int_to_ptr.vmem [resolvable:$true] %s478
      %481 = dma.vmem_to_hbm [thread:$0]  %s479, 128, %s4, [#allocation3]
    $region21: #{tpu_custom_call.1} parent=1 // pred_fallthru
      _
    // Predicated region
    $region22: #{tpu_custom_call.1} parent=1 // pred_check
      _
    $region23: #{tpu_custom_call.1} parent=1 // pred_check_branch
      %483 = sbr.rel (0) target = $region25
    $region24: #{tpu_custom_call.1} parent=1 // pred_region
      _
    $region25: #{tpu_custom_call.1} parent=1 // pred_fallthru
      _
    // Predicated region
    $region26: #{tpu_custom_call.1} parent=1 // pred_check
      _
    $region27: #{tpu_custom_call.1} parent=1 // pred_check_branch
      %485 = sbr.rel (0) target = $region29
    $region28: #{tpu_custom_call.1} parent=1 // pred_region
      _
    $region29: #{tpu_custom_call.1} parent=1 // pred_fallthru
      _
    // Predicated region
    $region30: #{tpu_custom_call.1} parent=1 // pred_check
      _
    $region31: #{tpu_custom_call.1} parent=1 // pred_check_branch
      %487 = sbr.rel (0) target = $region33
    $region32: #{tpu_custom_call.1} parent=1 // pred_region
      %488 = dma.done [#allocation3], 128
    $region33: #{tpu_custom_call.1} parent=1 // pred_fallthru
      _
    %489 = vsyncpa [#allocation3], 1

</llo_original>
